<compile_context>
chip_gen: v6e
topology: v6e:2x2x1
jax: 0.10.0
libtpu: 0.0.40
codegen_flags: <defaults>
</compile_context>

<pallas_src>
import jax
import jax.numpy as jnp
from jax.experimental import pallas as pl
from jax.experimental.pallas import tpu as pltpu

_P = 0.5                                   # dropout probability
_SCALE = 1.0 / (1.0 - _P)                  # inverted-dropout scale
_KEEP_THRESHOLD = 0x80000000               # keep iff uniform u32 >= p * 2**32

_LANES = 128                               # vreg lane width
_MAX_TILE_ROWS = 1024                      # 1024 x 128 f32 = 512 KiB per x tile
                                           # (x + bits + out, double-buffered ~5 MiB)


def _dropout_cat_kernel(x_ref, bits_ref, o_ref):
    # x_ref:    (TR, 128)    f32   -- tile of flattened x1
    # bits_ref: (2, TR, 128) u32   -- two independent random streams
    # o_ref:    (2, TR, 128) f32   -- row 0 = x3 tile, row 1 = x4 tile
    x_scaled = x_ref[...] * jnp.float32(_SCALE)      # one N-wide fmul per tile
    thr = jnp.uint32(_KEEP_THRESHOLD)
    zero = jnp.float32(0.0)
    o_ref[0] = jnp.where(bits_ref[0] >= thr, x_scaled, zero)
    o_ref[1] = jnp.where(bits_ref[1] >= thr, x_scaled, zero)
    # TODO(synk): x5 = torch.rand_like(x2) is dead code in the reference
    # module, so it is intentionally not materialized here.


def model_forward(x1, x2, key):
    """x1: (B, C, H, W) f32. x2 unused (dead in the reference).

    Returns (2*B, C, H, W): torch.cat((dropout(x1), dropout(x1)), dim=0).
    """
    del x2  # only feeds dead code in the reference module

    orig_shape = x1.shape
    n = int(x1.size)

    # Lane/sublane-dense padded layout: (rows, 128), rows a multiple of the
    # tile height (which is itself a multiple of 8).
    rows = max(8, -(-n // _LANES))
    rows = -(-rows // 8) * 8
    tile_rows = min(_MAX_TILE_ROWS, rows)
    rows = -(-rows // tile_rows) * tile_rows
    padded = rows * _LANES

    x_flat = jnp.pad(x1.reshape(-1).astype(jnp.float32), (0, padded - n))
    x2d = x_flat.reshape(rows, _LANES)

    # Fresh randomness per forward call via the supplied key.
    bits = jax.random.bits(key, (2, rows, _LANES), dtype=jnp.uint32)

    grid = (rows // tile_rows,)

    out = pl.pallas_call(
        _dropout_cat_kernel,
        out_shape=jax.ShapeDtypeStruct((2, rows, _LANES), jnp.float32),
        grid=grid,
        in_specs=[
            pl.BlockSpec((tile_rows, _LANES), lambda i: (i, 0)),
            pl.BlockSpec((2, tile_rows, _LANES), lambda i: (0, i, 0)),
        ],
        out_specs=pl.BlockSpec((2, tile_rows, _LANES), lambda i: (0, i, 0)),
        compiler_params=pltpu.CompilerParams(
            dimension_semantics=("parallel",),
            vmem_limit_bytes=64 * 1024 * 1024,
        ),
    )(x2d, bits)

    out_flat = out.reshape(2, padded)[:, :n]
    return out_flat.reshape((2 * orig_shape[0],) + tuple(orig_shape[1:]))


if __name__ == "__main__":
    key = jax.random.PRNGKey(0)
    k1, k2, kdrop = jax.random.split(key, 3)

    # Shapes from the reference module.
    x1 = jax.random.normal(k1, (1, 2, 2, 2), dtype=jnp.float32)
    x2 = jax.random.normal(k2, (2, 2, 2, 2), dtype=jnp.float32)

    y = model_forward(x1, x2, kdrop)
    y = jax.block_until_ready(y)

    assert y.shape == (2, 2, 2, 2), y.shape
    assert y.dtype == jnp.float32
    # Dropout invariant: every element is either 0 or x/(1-p) = 2*x.
    ref = jnp.broadcast_to(x1 * 2.0, (2, 2, 2, 2))
    ok = jnp.all((y == 0.0) | (jnp.abs(y - ref) < 1e-6))
    assert bool(ok), "dropout output is not in {0, x/(1-p)}"

    print("KERNEL_OK")
</pallas_src>

<mosaic_0001>
module attributes {stable_mosaic.version = 11 : i64} {
  func.func @_dropout_cat_kernel(%arg0: i32, %arg1: memref<8x128xf32, #tpu.memory_space<vmem>>, %arg2: memref<2x8x128xi32, #tpu.memory_space<vmem>>, %arg3: memref<2x8x128xf32, #tpu.memory_space<vmem>>) attributes {dimension_semantics = [#tpu.dimension_semantics<parallel>], iteration_bounds = array<i64: 1>, scalar_prefetch = 0 : i64, scratch_operands = 0 : i64, tpu.core_type = #tpu.core_type<tc>, window_params = [{transform_indices = @transform_0, window_bounds = array<i64: 8, 128>}, {transform_indices = @transform_1, window_bounds = array<i64: 2, 8, 128>}, {transform_indices = @transform_2, window_bounds = array<i64: 2, 8, 128>}]} {
    %c0 = arith.constant 0 : index
    %c0_0 = arith.constant 0 : index
    %0 = vector.load %arg1[%c0, %c0_0] : memref<8x128xf32, #tpu.memory_space<vmem>>, vector<8x128xf32>
    %cst = arith.constant 2.000000e+00 : f32
    %1 = vector.broadcast %cst : f32 to vector<8x128xf32>
    %2 = arith.mulf %0, %1 : vector<8x128xf32>
    %c0_1 = arith.constant 0 : index
    %c0_2 = arith.constant 0 : index
    %c0_3 = arith.constant 0 : index
    %3 = vector.load %arg2[%c0_1, %c0_2, %c0_3] : memref<2x8x128xi32, #tpu.memory_space<vmem>>, vector<1x8x128xi32>
    %4 = vector.shape_cast %3 : vector<1x8x128xi32> to vector<8x128xi32>
    %c-2147483648_i32 = arith.constant -2147483648 : i32
    %5 = vector.broadcast %c-2147483648_i32 : i32 to vector<8x128xi32>
    %6 = arith.cmpi uge, %4, %5 : vector<8x128xi32>
    %cst_4 = arith.constant 0.000000e+00 : f32
    %7 = vector.broadcast %cst_4 : f32 to vector<8x128xf32>
    %8 = arith.select %6, %2, %7 : vector<8x128xi1>, vector<8x128xf32>
    %c0_5 = arith.constant 0 : index
    %c0_6 = arith.constant 0 : index
    %c0_7 = arith.constant 0 : index
    %9 = vector.load %arg3[%c0_5, %c0_6, %c0_7] : memref<2x8x128xf32, #tpu.memory_space<vmem>>, vector<1x8x128xf32>
    %10 = vector.shape_cast %9 : vector<1x8x128xf32> to vector<8x128xf32>
    %11 = vector.shape_cast %8 : vector<8x128xf32> to vector<1x8x128xf32>
    tpu.vector_store %arg3[%c0_5, %c0_6, %c0_7], %11 {strides = array<i32>} : memref<2x8x128xf32, #tpu.memory_space<vmem>>, vector<1x8x128xf32>,
    %c1 = arith.constant 1 : index
    %c0_8 = arith.constant 0 : index
    %c0_9 = arith.constant 0 : index
    %12 = vector.load %arg2[%c1, %c0_8, %c0_9] : memref<2x8x128xi32, #tpu.memory_space<vmem>>, vector<1x8x128xi32>
    %13 = vector.shape_cast %12 : vector<1x8x128xi32> to vector<8x128xi32>
    %c-2147483648_i32_10 = arith.constant -2147483648 : i32
    %14 = vector.broadcast %c-2147483648_i32_10 : i32 to vector<8x128xi32>
    %15 = arith.cmpi uge, %13, %14 : vector<8x128xi32>
    %cst_11 = arith.constant 0.000000e+00 : f32
    %16 = vector.broadcast %cst_11 : f32 to vector<8x128xf32>
    %17 = arith.select %15, %2, %16 : vector<8x128xi1>, vector<8x128xf32>
    %c1_12 = arith.constant 1 : index
    %c0_13 = arith.constant 0 : index
    %c0_14 = arith.constant 0 : index
    %18 = vector.load %arg3[%c1_12, %c0_13, %c0_14] : memref<2x8x128xf32, #tpu.memory_space<vmem>>, vector<1x8x128xf32>
    %19 = vector.shape_cast %18 : vector<1x8x128xf32> to vector<8x128xf32>
    %20 = vector.shape_cast %17 : vector<8x128xf32> to vector<1x8x128xf32>
    tpu.vector_store %arg3[%c1_12, %c0_13, %c0_14], %20 {strides = array<i32>} : memref<2x8x128xf32, #tpu.memory_space<vmem>>, vector<1x8x128xf32>,
    return
  }
  func.func @transform_0(%arg0: i32) -> (i32, i32) {
    %c0_i32 = arith.constant 0 : i32
    %c0_i32_0 = arith.constant 0 : i32
    return %arg0, %c0_i32 : i32, i32
  }
  func.func @transform_1(%arg0: i32) -> (i32, i32, i32) {
    %c0_i32 = arith.constant 0 : i32
    %c0_i32_0 = arith.constant 0 : i32
    %c0_i32_1 = arith.constant 0 : i32
    return %c0_i32, %arg0, %c0_i32_0 : i32, i32, i32
  }
  func.func @transform_2(%arg0: i32) -> (i32, i32, i32) {
    %c0_i32 = arith.constant 0 : i32
    %c0_i32_0 = arith.constant 0 : i32
    %c0_i32_1 = arith.constant 0 : i32
    return %c0_i32, %arg0, %c0_i32_0 : i32, i32, i32
  }
}

</mosaic_0001>

<llo_original>
// kernel: tpu_custom_call.1
$region0: #{tpu_custom_call.1}
  #allocation0 [shape = 'u32[]', space=smem, size = 0x4, offset = 0x4, fixed_abs, tag = 'smem constant byte address 0x4 - core index']
  #allocation1 [shape = 'u32[144,128]{1,0:T(1,128)}', space=vmem, size = 0x12000, scoped, tag = 'internal scratch']
  %s0 = inlined_call_operand.hbm [shape: f32[8,128], index: 0, kind: input, shape index: {}]
  %s1 = inlined_call_operand.hbm [shape: u32[2,8,128], index: 1, kind: input, shape index: {}]
  %s2 = inlined_call_operand.hbm [shape: f32[2,8,128], index: 2, kind: output, shape index: {}]
  %s3 = sld [smem:[#allocation0]]
  $region26: #{tpu_custom_call.1} parent=0
    _
  %s5 = ssub.s32 1, %s3
  %s6 = scalar_select 0, %s5, %s3
  $region1: #{tpu_custom_call.1} parent=0
    #allocation2 [shape = 'u8[4096]{0}', space=vmem, size = 0x1000, scoped, tag = 'input window, operand 0, single buffered']
    #allocation3 [shape = 's32[1]{0}', space=sflag, size = 0x4, scoped, tag = 'scoped memory for tpu_custom_call.1']
    #allocation4 [shape = 's32[1]{0}', space=sflag, size = 0x4, scoped, tag = 'scoped memory for tpu_custom_call.1']
    #allocation5 [shape = 'u8[8192]{0}', space=vmem, size = 0x2000, scoped, tag = 'input window, operand 1, single buffered']
    #allocation6 [shape = 's32[1]{0}', space=sflag, size = 0x4, scoped, tag = 'scoped memory for tpu_custom_call.1']
    #allocation7 [shape = 'u8[8192]{0}', space=vmem, size = 0x2000, scoped, tag = 'output window, operand 0, single buffered']
    %7 = vsyncpa [#allocation3], 0
    %8 = vsyncpa [#allocation6], 0
    %9 = vsyncpa [#allocation4], 0
    // Predicated region
    $region2: #{tpu_custom_call.1} parent=1 // pred_check
      _
    $region3: #{tpu_custom_call.1} parent=1 // pred_check_branch
      %11 = sbr.rel (0) target = $region5
    $region4: #{tpu_custom_call.1} parent=1 // pred_region
      %s13 = ssub.s32 128, 128
      %14 = vsyncadd [#allocation3], %s13
      %s16 = sshll.u32 [#allocation2], 4
      %s17 = int_to_ptr.vmem [resolvable:$true] %s16
      %19 = dma.hbm_to_vmem [thread:$0]  %s0, 128, %s17, [#allocation3]
    $region5: #{tpu_custom_call.1} parent=1 // pred_fallthru
      _
    // Predicated region
    $region6: #{tpu_custom_call.1} parent=1 // pred_check
      _
    $region7: #{tpu_custom_call.1} parent=1 // pred_check_branch
      %21 = sbr.rel (0) target = $region9
    $region8: #{tpu_custom_call.1} parent=1 // pred_region
      %s23 = ssub.s32 256, 256
      %24 = vsyncadd [#allocation6], %s23
      %s25 = sshll.u32 [#allocation5], 4
      %s26 = int_to_ptr.vmem [resolvable:$true] %s25
      %31 = dma.hbm_to_vmem [thread:$0]  %s1, 256, %s26, [#allocation6], 128, 128, 8
    $region9: #{tpu_custom_call.1} parent=1 // pred_fallthru
      _
    // Predicated region
    $region10: #{tpu_custom_call.1} parent=1 // pred_check
      _
    $region11: #{tpu_custom_call.1} parent=1 // pred_check_branch
      %33 = sbr.rel (0) target = $region13
    $region12: #{tpu_custom_call.1} parent=1 // pred_region
      %34 = dma.done [#allocation3], 128
    $region13: #{tpu_custom_call.1} parent=1 // pred_fallthru
      _
    // Predicated region
    $region14: #{tpu_custom_call.1} parent=1 // pred_check
      _
    $region15: #{tpu_custom_call.1} parent=1 // pred_check_branch
      %36 = sbr.rel (0) target = $region17
    $region16: #{tpu_custom_call.1} parent=1 // pred_region
      %37 = dma.done [#allocation6], 256
    $region17: #{tpu_custom_call.1} parent=1 // pred_fallthru
      _
    %v38 = vld [vmem:[#allocation2] sm:$0xff]
    %v39 = vmul.f32 %v38, 2.0
    %v40 = vld [vmem:[#allocation5] sm:$0xff]
    %vm41 = vcmp.ge.u32.totalorder %v40, 2147483648
    %v42 = vsel %vm41, %v39, 0.0
    %43 = vst [vmem:[#allocation7] sm:$0xff] %v42
    %s44 = scalar_lea.vmem [#allocation5], 8
    %v45 = vld [vmem:[%s44] sm:$0xff]
    %vm46 = vcmp.ge.u32.totalorder %v45, 2147483648
    %v47 = vsel %vm46, %v39, 0.0
    %s48 = scalar_lea.vmem [#allocation7], 8
    %49 = vst [vmem:[%s48] sm:$0xff] %v47
    // Predicated region
    $region18: #{tpu_custom_call.1} parent=1 // pred_check
      _
    $region19: #{tpu_custom_call.1} parent=1 // pred_check_branch
      %51 = sbr.rel (0) target = $region21
    $region20: #{tpu_custom_call.1} parent=1 // pred_region
      %s53 = ssub.s32 256, 256
      %54 = vsyncadd [#allocation4], %s53
      %s55 = sshll.u32 [#allocation7], 4
      %s56 = int_to_ptr.vmem [resolvable:$true] %s55
      %61 = dma.vmem_to_hbm [thread:$0]  %s56, 256, %s2, [#allocation4], 128, 128, 8
    $region21: #{tpu_custom_call.1} parent=1 // pred_fallthru
      _
    // Predicated region
    $region22: #{tpu_custom_call.1} parent=1 // pred_check
      _
    $region23: #{tpu_custom_call.1} parent=1 // pred_check_branch
      %63 = sbr.rel (0) target = $region25
    $region24: #{tpu_custom_call.1} parent=1 // pred_region
      %64 = dma.done [#allocation4], 256
    $region25: #{tpu_custom_call.1} parent=1 // pred_fallthru
      _
    %65 = vsyncpa [#allocation3], 1
    %66 = vsyncpa [#allocation6], 1
    %67 = vsyncpa [#allocation4], 1

</llo_original>
